<compile_context>
chip_gen: v5e
topology: v5e:2x2
jax: 0.10.0
libtpu: 0.0.40
codegen_flags: <defaults>
</compile_context>

<pallas_src>
import math

import jax
import jax.numpy as jnp
from jax.experimental import pallas as pl
from jax.experimental.pallas import tpu as pltpu

_LANE = 128      # vreg lane width  (minor dim)
_SUBLANE = 8     # vreg sublane width (second-minor dim)


def _round_up(v, m):
    return -(-v // m) * m


def _pad_to(a, target_shape):
    pads = [(0, t - s) for s, t in zip(a.shape, target_shape)]
    if any(hi for _, hi in pads):
        a = jnp.pad(a, pads)
    return a


def _vmem_capacity_bytes():
    """Physical per-core VMEM bytes, with a conservative (v7x) fallback."""
    try:
        cap = getattr(pltpu.get_tpu_info(), "vmem_capacity_bytes", None)
        if cap:
            return int(cap)
    except Exception:
        pass
    return 64 * 1024 * 1024


def _gcn_kernel(x_ref, w_ref, adj_ref, out_ref):
    """out[b] = adj[b] @ (x[b] @ w[b]) for every batch row of the block."""
    # support[b] = x[b] @ w[b]   : (B, N, F) x (B, F, F) -> (B, N, F)
    support = jax.lax.dot_general(
        x_ref[...], w_ref[...],
        dimension_numbers=(((2,), (1,)), ((0,), (0,))),
        preferred_element_type=jnp.float32,
    )
    # Keep both operands of the second (larger) contraction in the compute
    # dtype: with compute_dtype=bf16 this avoids a slow mixed bf16 x f32
    # multi-pass MXU path. Accumulation stays f32 via preferred_element_type.
    support = support.astype(adj_ref.dtype)
    # out[b] = adj[b] @ support[b] : (B, N, N) x (B, N, F) -> (B, N, F)
    out = jax.lax.dot_general(
        adj_ref[...], support,
        dimension_numbers=(((2,), (1,)), ((0,), (0,))),
        preferred_element_type=jnp.float32,
    )
    # NOTE: bias is intentionally NOT added -- the reference PyTorch forward
    # evaluates `output + self.bias` but discards the result.
    out_ref[...] = out.astype(out_ref.dtype)


def graph_convolution(x, weight, adj, *, compute_dtype=None):
    """out[b] = adj[b] @ (x[b] @ weight[b]) for every batch element b.

    compute_dtype: optionally cast operands (e.g. jnp.bfloat16) for MXU-native
    throughput on v5e/v6e/v7x; accumulation stays f32 and the output keeps the
    original input dtype. Default None preserves exact f32 reference numerics.
    """
    B, N, F_in = x.shape
    Bw, F_in_w, F_out = weight.shape
    assert (Bw, F_in_w) == (B, F_in), "weight must be (B, F_in, F_out)"
    assert adj.shape == (B, N, N), "adj must be (B, N, N)"
    assert F_in == F_out, "reference module requires in_features == out_features"

    out_dtype = x.dtype
    if compute_dtype is not None:
        x = x.astype(compute_dtype)
        weight = weight.astype(compute_dtype)
        adj = adj.astype(compute_dtype)

    itemsize = jnp.dtype(x.dtype).itemsize
    out_itemsize = jnp.dtype(out_dtype).itemsize

    # ---- Lane-dense padding --------------------------------------------------
    # Minor dims padded to multiples of 128 so stores are unmasked and MXU
    # operands are dense; N is also adj's lane dim, so it gets the lane pad too.
    Np = _round_up(N, _LANE)
    Fp = _round_up(max(F_in, F_out), _LANE)

    x_p = _pad_to(x, (B, Np, Fp))
    w_p = _pad_to(weight, (B, Fp, Fp))
    adj_p = _pad_to(adj, (B, Np, Np))

    # ---- VMEM budgeting ------------------------------------------------------
    x_b = Np * Fp * itemsize
    w_b = Fp * Fp * itemsize
    adj_b = Np * Np * itemsize
    out_b = Np * Fp * out_itemsize
    f32_tmp_b = 2 * Np * Fp * 4          # f32 `support` + pre-cast `out` per batch row

    total_bytes = B * (x_b + w_b + adj_b + out_b)
    flops = 2 * B * Np * Fp * (Fp + Np)
    cost = pl.CostEstimate(flops=flops, transcendentals=0, bytes_accessed=total_bytes)

    vmem_cap = _vmem_capacity_bytes()

    # Grid-less single shot only when the whole problem is tiny (per-grid-step
    # overhead would dominate); otherwise pipeline over the batch axis.
    single_shot = (total_bytes + B * f32_tmp_b) <= min(512 * 1024, vmem_cap // 4)

    if single_shot:
        resident = total_bytes + B * f32_tmp_b
        vmem_limit = int(min(vmem_cap, max(resident * 5 // 4 + (4 << 20), 32 << 20)))
        out_p = pl.pallas_call(
            _gcn_kernel,
            out_shape=jax.ShapeDtypeStruct((B, Np, Fp), out_dtype),
            in_specs=[
                pl.BlockSpec(memory_space=pltpu.MemorySpace.VMEM),
                pl.BlockSpec(memory_space=pltpu.MemorySpace.VMEM),
                pl.BlockSpec(memory_space=pltpu.MemorySpace.VMEM),
            ],
            out_specs=pl.BlockSpec(memory_space=pltpu.MemorySpace.VMEM),
            cost_estimate=cost,
            compiler_params=pltpu.CompilerParams(vmem_limit_bytes=vmem_limit),
        )(x_p, w_p, adj_p)
    else:
        # Per-batch pipelined grid: BlockSpec double-buffering hides HBM DMA
        # under MXU work, and the "parallel" batch axis lets v7x shard the
        # batch across both TensorCores.
        resident = 2 * (x_b + w_b + adj_b) + 2 * out_b + f32_tmp_b
        if resident > (vmem_cap * 3) // 4:
            # TODO(synk): add a fully tiled reduction path for huge graphs:
            # grid=(B, N//tn, N//tk) with the reduction axis last, an f32 VMEM
            # accumulator initialised / written back under pl.when, and
            # dimension_semantics=("parallel", "parallel", "arbitrary");
            # tile edges re-swept per generation (roughly half the v6e tile
            # footprint on v7x's 64 MiB VMEM).
            raise NotImplementedError(
                f"per-batch blocks need ~{resident} bytes of VMEM (capacity "
                f"{vmem_cap} bytes); a tiled-reduction path is required")
        vmem_limit = int(min(vmem_cap, max(resident * 5 // 4 + (4 << 20), 32 << 20)))
        out_p = pl.pallas_call(
            _gcn_kernel,
            out_shape=jax.ShapeDtypeStruct((B, Np, Fp), out_dtype),
            grid=(B,),
            in_specs=[
                pl.BlockSpec((1, Np, Fp), lambda b: (b, 0, 0)),
                pl.BlockSpec((1, Fp, Fp), lambda b: (b, 0, 0)),
                pl.BlockSpec((1, Np, Np), lambda b: (b, 0, 0)),
            ],
            out_specs=pl.BlockSpec((1, Np, Fp), lambda b: (b, 0, 0)),
            cost_estimate=cost,
            compiler_params=pltpu.CompilerParams(
                dimension_semantics=("parallel",),
                vmem_limit_bytes=vmem_limit,
            ),
        )(x_p, w_p, adj_p)

    if (Np, Fp) != (N, F_out):
        out_p = out_p[:, :N, :F_out]
    return out_p


if __name__ == "__main__":
    # Small shapes consistent with the module: per-batch weight, square features.
    batch_size = 4        # module's `batch_size` (kept small for the example)
    num_nodes = 16
    in_features = 32
    out_features = 32     # must equal in_features (see NOTE above)

    key = jax.random.PRNGKey(0)
    k_x, k_adj, k_w, k_b = jax.random.split(key, 4)

    # Deterministic parameter init mirroring reset_parameters():
    # uniform(-stdv, stdv) with stdv = 1/sqrt(in_features)  (weight.size(1))
    stdv = 1.0 / math.sqrt(in_features)
    weight = jax.random.uniform(
        k_w, (batch_size, in_features, out_features),
        minval=-stdv, maxval=stdv, dtype=jnp.float32)
    bias = jax.random.uniform(
        k_b, (out_features,), minval=-stdv, maxval=stdv, dtype=jnp.float32)
    del bias  # created to match __init__, but the forward never actually uses it

    x = jax.random.normal(k_x, (batch_size, num_nodes, in_features), dtype=jnp.float32)
    adj = jax.random.normal(k_adj, (batch_size, num_nodes, num_nodes), dtype=jnp.float32)

    out = graph_convolution(x, weight, adj)
    out = jax.block_until_ready(out)

    # Pure-JAX reference check of the same semantics.
    ref = jnp.einsum("bnm,bmo->bno", adj, jnp.einsum("bni,bio->bno", x, weight))
    assert out.shape == (batch_size, num_nodes, out_features)
    assert jnp.allclose(out, ref, atol=1e-4, rtol=1e-4)

    print("KERNEL_OK")
</pallas_src>

<mosaic_0001>
module attributes {stable_mosaic.version = 11 : i64} {
  func.func @_gcn_kernel(%arg0: i32, %arg1: memref<1x128x128xf32, #tpu.memory_space<vmem>>, %arg2: memref<1x128x128xf32, #tpu.memory_space<vmem>>, %arg3: memref<1x128x128xf32, #tpu.memory_space<vmem>>, %arg4: memref<1x128x128xf32, #tpu.memory_space<vmem>>) attributes {dimension_semantics = [#tpu.dimension_semantics<parallel>], iteration_bounds = array<i64: 4>, scalar_prefetch = 0 : i64, scratch_operands = 0 : i64, tpu.core_type = #tpu.core_type<tc>, window_params = [{transform_indices = @transform_0, window_bounds = array<i64: 1, 128, 128>}, {transform_indices = @transform_1, window_bounds = array<i64: 1, 128, 128>}, {transform_indices = @transform_2, window_bounds = array<i64: 1, 128, 128>}, {transform_indices = @transform_3, window_bounds = array<i64: 1, 128, 128>}]} {
    %c0 = arith.constant 0 : index
    %c0_0 = arith.constant 0 : index
    %c0_1 = arith.constant 0 : index
    %0 = vector.load %arg1[%c0, %c0_0, %c0_1] : memref<1x128x128xf32, #tpu.memory_space<vmem>>, vector<1x128x128xf32>
    %c0_2 = arith.constant 0 : index
    %c0_3 = arith.constant 0 : index
    %c0_4 = arith.constant 0 : index
    %1 = vector.load %arg2[%c0_2, %c0_3, %c0_4] : memref<1x128x128xf32, #tpu.memory_space<vmem>>, vector<1x128x128xf32>
    %cst = arith.constant dense<0.000000e+00> : vector<1x128x128xf32>
    %2 = tpu.matmul %0, %1, %cst {dimension_numbers = #tpu.dot_dimension_numbers<[2], [1], [1], [2], [0, 0, 0, 1, 1, 2], [0], [0]>} : vector<1x128x128xf32>, vector<1x128x128xf32>, vector<1x128x128xf32> -> vector<1x128x128xf32>
    %c0_5 = arith.constant 0 : index
    %c0_6 = arith.constant 0 : index
    %c0_7 = arith.constant 0 : index
    %3 = vector.load %arg3[%c0_5, %c0_6, %c0_7] : memref<1x128x128xf32, #tpu.memory_space<vmem>>, vector<1x128x128xf32>
    %cst_8 = arith.constant dense<0.000000e+00> : vector<1x128x128xf32>
    %4 = tpu.matmul %3, %2, %cst_8 {dimension_numbers = #tpu.dot_dimension_numbers<[2], [1], [1], [2], [0, 0, 0, 1, 1, 2], [0], [0]>} : vector<1x128x128xf32>, vector<1x128x128xf32>, vector<1x128x128xf32> -> vector<1x128x128xf32>
    %c0_9 = arith.constant 0 : index
    %c0_10 = arith.constant 0 : index
    %c0_11 = arith.constant 0 : index
    %5 = vector.load %arg4[%c0_9, %c0_10, %c0_11] : memref<1x128x128xf32, #tpu.memory_space<vmem>>, vector<1x128x128xf32>
    tpu.vector_store %arg4[%c0_9, %c0_10, %c0_11], %4 {strides = array<i32>} : memref<1x128x128xf32, #tpu.memory_space<vmem>>, vector<1x128x128xf32>,
    return
  }
  func.func @transform_0(%arg0: i32) -> (i32, i32, i32) {
    %c0_i32 = arith.constant 0 : i32
    %c0_i32_0 = arith.constant 0 : i32
    %c0_i32_1 = arith.constant 0 : i32
    return %arg0, %c0_i32, %c0_i32_0 : i32, i32, i32
  }
  func.func @transform_1(%arg0: i32) -> (i32, i32, i32) {
    %c0_i32 = arith.constant 0 : i32
    %c0_i32_0 = arith.constant 0 : i32
    %c0_i32_1 = arith.constant 0 : i32
    return %arg0, %c0_i32, %c0_i32_0 : i32, i32, i32
  }
  func.func @transform_2(%arg0: i32) -> (i32, i32, i32) {
    %c0_i32 = arith.constant 0 : i32
    %c0_i32_0 = arith.constant 0 : i32
    %c0_i32_1 = arith.constant 0 : i32
    return %arg0, %c0_i32, %c0_i32_0 : i32, i32, i32
  }
  func.func @transform_3(%arg0: i32) -> (i32, i32, i32) {
    %c0_i32 = arith.constant 0 : i32
    %c0_i32_0 = arith.constant 0 : i32
    %c0_i32_1 = arith.constant 0 : i32
    return %arg0, %c0_i32, %c0_i32_0 : i32, i32, i32
  }
}

</mosaic_0001>

<llo_original>
// kernel: tpu_custom_call.1
$region0: #{tpu_custom_call.1}
  #allocation0 [shape = 'u32[]', space=smem, size = 0x4, offset = 0x4, fixed_abs, tag = 'smem constant byte address 0x4 - core index']
  #allocation1 [shape = 'u32[72,128]{1,0:T(1,128)}', space=vmem, size = 0x9000, scoped, tag = 'internal scratch']
  %s0 = inlined_call_operand.hbm [shape: f32[4,128,128], index: 0, kind: input, shape index: {}]
  %s1 = inlined_call_operand.hbm [shape: f32[4,128,128], index: 1, kind: input, shape index: {}]
  %s2 = inlined_call_operand.hbm [shape: f32[4,128,128], index: 2, kind: input, shape index: {}]
  %s3 = inlined_call_operand.hbm [shape: f32[4,128,128], index: 3, kind: output, shape index: {}]
  %s4 = sld [smem:[#allocation0]]
  $region57: #{tpu_custom_call.1} parent=0
    _
  %s6 = ssub.s32 1, %s4
  %s7 = scalar_select 0, %s6, %s4
  $region1: #{tpu_custom_call.1} parent=0
    #allocation2 [shape = 'u8[131072]{0}', space=vmem, size = 0x20000, scoped, tag = 'input window, operand 0']
    #allocation3 [shape = 's32[2]{0}', space=sflag, size = 0x8, scoped, tag = 'scoped memory for tpu_custom_call.1']
    #allocation4 [shape = 's32[2]{0}', space=sflag, size = 0x8, scoped, tag = 'scoped memory for tpu_custom_call.1']
    #allocation5 [shape = 'u8[131072]{0}', space=vmem, size = 0x20000, scoped, tag = 'input window, operand 1']
    #allocation6 [shape = 's32[2]{0}', space=sflag, size = 0x8, scoped, tag = 'scoped memory for tpu_custom_call.1']
    #allocation7 [shape = 'u8[131072]{0}', space=vmem, size = 0x20000, scoped, tag = 'input window, operand 2']
    #allocation8 [shape = 'u8[131072]{0}', space=vmem, size = 0x20000, scoped, tag = 'output window, operand 0']
    %8 = vsyncpa [#allocation3], 0
    %s9 = scalar_lea.sflag [#allocation3], 1
    %10 = vsyncpa %s9, 0
    %11 = vsyncpa [#allocation6], 0
    %s12 = scalar_lea.sflag [#allocation6], 1
    %13 = vsyncpa %s12, 0
    %14 = vsyncpa [#allocation4], 0
    %s15 = scalar_lea.sflag [#allocation4], 1
    %16 = vsyncpa %s15, 0
    loop: start=0, step=1, limit=6
    $region2: #{tpu_custom_call.1} parent=1 // loop_pre_header
      _
    $region3: #{tpu_custom_call.1} parent=1 // loop_header
      %s18 = sphi 0, %s22
      %p19 = scmp.ge.s32.totalorder %s18, 6
      %s28 = sphi 0, %s30
      %s31 = sphi 0, %s28
      %s32 = sphi 0, %s31
      %s48 = sphi 0, %s32
      %s54 = sphi 0, %s56
      %s57 = sphi 0, %s54
      %s58 = sphi 0, %s57
      %s74 = sphi 0, %s58
      %s80 = sphi 0, %s82
      %s83 = sphi 0, %s80
      %s84 = sphi 0, %s83
      %s100 = sphi 0, %s84
      %s106 = sphi 0, %s108
      %s109 = sphi 0, %s106
      %s110 = sphi 0, %s109
      %s126 = sphi 0, %s110
    $region4: #{tpu_custom_call.1} parent=1 // loop_header_branch
      %21 = sbr.rel (%p19) target = $region8
    $region5: #{tpu_custom_call.1} parent=1 // loop_body
      %s23 = ssub.s32 %s18, 1
      %s24 = ssub.s32 %s18, 2
      %s25 = sadd.s32 %s18, 1
      %s26 = ssub.s32 %s18, %s25
      %p27 = scmp.eq.s32.totalorder %s26, 0
      %s29 = sadd.s32 %s28, 1
      %s30 = scalar_select %p27, %s28, %s29
      %p33 = pneg %p27
      %p34 = scmp.eq.s32.totalorder %s18, 3
      %p35 = por %p33, %p34
      %p36 = scmp.ne.s32.totalorder %s28, %s31
      %p37 = scmp.eq.s32.totalorder %s18, 0
      %p38 = por %p36, %p37
      %p39 = scmp.ne.s32.totalorder %s28, %s31
      %p40 = scmp.eq.s32.totalorder %s23, 3
      %p41 = por %p39, %p40
      %p42 = scmp.ne.s32.totalorder %s31, %s32
      %p43 = scmp.eq.s32.totalorder %s23, 0
      %p44 = por %p42, %p43
      %p45 = scmp.ne.s32.totalorder %s31, %s32
      %p46 = scmp.eq.s32.totalorder %s24, 3
      %p47 = por %p45, %p46
      %p49 = scmp.ne.s32.totalorder %s32, %s48
      %p50 = scmp.eq.s32.totalorder %s24, 0
      %p51 = por %p49, %p50
      %s52 = ssub.s32 %s18, %s25
      %p53 = scmp.eq.s32.totalorder %s52, 0
      %s55 = sadd.s32 %s54, 1
      %s56 = scalar_select %p53, %s54, %s55
      %p59 = pneg %p53
      %p60 = scmp.eq.s32.totalorder %s18, 3
      %p61 = por %p59, %p60
      %p62 = scmp.ne.s32.totalorder %s54, %s57
      %p63 = scmp.eq.s32.totalorder %s18, 0
      %p64 = por %p62, %p63
      %p65 = scmp.ne.s32.totalorder %s54, %s57
      %p66 = scmp.eq.s32.totalorder %s23, 3
      %p67 = por %p65, %p66
      %p68 = scmp.ne.s32.totalorder %s57, %s58
      %p69 = scmp.eq.s32.totalorder %s23, 0
      %p70 = por %p68, %p69
      %p71 = scmp.ne.s32.totalorder %s57, %s58
      %p72 = scmp.eq.s32.totalorder %s24, 3
      %p73 = por %p71, %p72
      %p75 = scmp.ne.s32.totalorder %s58, %s74
      %p76 = scmp.eq.s32.totalorder %s24, 0
      %p77 = por %p75, %p76
      %s78 = ssub.s32 %s18, %s25
      %p79 = scmp.eq.s32.totalorder %s78, 0
      %s81 = sadd.s32 %s80, 1
      %s82 = scalar_select %p79, %s80, %s81
      %p85 = pneg %p79
      %p86 = scmp.eq.s32.totalorder %s18, 3
      %p87 = por %p85, %p86
      %p88 = scmp.ne.s32.totalorder %s80, %s83
      %p89 = scmp.eq.s32.totalorder %s18, 0
      %p90 = por %p88, %p89
      %p91 = scmp.ne.s32.totalorder %s80, %s83
      %p92 = scmp.eq.s32.totalorder %s23, 3
      %p93 = por %p91, %p92
      %p94 = scmp.ne.s32.totalorder %s83, %s84
      %p95 = scmp.eq.s32.totalorder %s23, 0
      %p96 = por %p94, %p95
      %p97 = scmp.ne.s32.totalorder %s83, %s84
      %p98 = scmp.eq.s32.totalorder %s24, 3
      %p99 = por %p97, %p98
      %p101 = scmp.ne.s32.totalorder %s84, %s100
      %p102 = scmp.eq.s32.totalorder %s24, 0
      %p103 = por %p101, %p102
      %s104 = ssub.s32 %s18, %s25
      %p105 = scmp.eq.s32.totalorder %s104, 0
      %s107 = sadd.s32 %s106, 1
      %s108 = scalar_select %p105, %s106, %s107
      %p111 = pneg %p105
      %p112 = scmp.eq.s32.totalorder %s18, 3
      %p113 = por %p111, %p112
      %p114 = scmp.ne.s32.totalorder %s106, %s109
      %p115 = scmp.eq.s32.totalorder %s18, 0
      %p116 = por %p114, %p115
      %p117 = scmp.ne.s32.totalorder %s106, %s109
      %p118 = scmp.eq.s32.totalorder %s23, 3
      %p119 = por %p117, %p118
      %p120 = scmp.ne.s32.totalorder %s109, %s110
      %p121 = scmp.eq.s32.totalorder %s23, 0
      %p122 = por %p120, %p121
      %p123 = scmp.ne.s32.totalorder %s109, %s110
      %p124 = scmp.eq.s32.totalorder %s24, 3
      %p125 = por %p123, %p124
      %p127 = scmp.ne.s32.totalorder %s110, %s126
      %p128 = scmp.eq.s32.totalorder %s24, 0
      %p129 = por %p127, %p128
      %p130 = scmp.le.s32.totalorder 1, %s18
      %p131 = scmp.lt.s32.totalorder %s18, 5
      %p132 = pnand %p130, %p131
      %p133 = pneg %p132
      // Predicated region
      $region9: #{tpu_custom_call.1} parent=5 // pred_check
        _
      $region10: #{tpu_custom_call.1} parent=5 // pred_check_branch
        %135 = sbr.rel (%p132) target = $region12
      $region11: #{tpu_custom_call.1} parent=5 // pred_region
        %s136 = ssub.s32 %s18, 1
      $region12: #{tpu_custom_call.1} parent=5 // pred_fallthru
        _
      %p137 = scmp.lt.s32.totalorder %s18, 4
      // Predicated region
      $region13: #{tpu_custom_call.1} parent=5 // pred_check
        %p138 = pneg %p137
      $region14: #{tpu_custom_call.1} parent=5 // pred_check_branch
        %140 = sbr.rel (%p138) target = $region16
      $region15: #{tpu_custom_call.1} parent=5 // pred_region
        // Predicated region
        $region17: #{tpu_custom_call.1} parent=15 // pred_check
          %p141 = pneg %p38
        $region18: #{tpu_custom_call.1} parent=15 // pred_check_branch
          %143 = sbr.rel (%p141) target = $region20
        $region19: #{tpu_custom_call.1} parent=15 // pred_region
          %s144 = sand.u32 %s28, 1
          %s145 = scalar_lea.sflag [#allocation3], %s144
          %s146 = sand.u32 %s28, 1
          %s147 = smul.addr %s146, 128
          %s148 = scalar_lea.vmem [#allocation2], %s147
          %150 = vsyncadd %s145, 0
          %s151 = smul.addr %s18, 16
          %s152 = smul.addr %s151, 8
          %s153 = scalar_lea.hbm %s0, %s152
          %s154 = sshll.u32 %s153, 4
          %s155 = int_to_ptr.hbm [resolvable:$true] %s154
          %s156 = sshll.u32 %s148, 4
          %s157 = int_to_ptr.vmem [resolvable:$true] %s156
          %162 = dma.hbm_to_vmem [thread:$0]  %s155, 2048, %s157, %s145, 128, 128, 8
        $region20: #{tpu_custom_call.1} parent=15 // pred_fallthru
          _
        // Predicated region
        $region21: #{tpu_custom_call.1} parent=15 // pred_check
          %p163 = pneg %p64
        $region22: #{tpu_custom_call.1} parent=15 // pred_check_branch
          %165 = sbr.rel (%p163) target = $region24
        $region23: #{tpu_custom_call.1} parent=15 // pred_region
          %s166 = sand.u32 %s18, 1
          %s167 = scalar_lea.sflag [#allocation6], %s166
          %s168 = sand.u32 %s54, 1
          %s169 = smul.addr %s168, 128
          %s170 = scalar_lea.vmem [#allocation5], %s169
          %172 = vsyncadd %s167, 0
          %s173 = smul.addr %s18, 16
          %s174 = smul.addr %s173, 8
          %s175 = scalar_lea.hbm %s1, %s174
          %s176 = sshll.u32 %s175, 4
          %s177 = int_to_ptr.hbm [resolvable:$true] %s176
          %s178 = sshll.u32 %s170, 4
          %s179 = int_to_ptr.vmem [resolvable:$true] %s178
          %184 = dma.hbm_to_vmem [thread:$0]  %s177, 2048, %s179, %s167, 128, 128, 8
        $region24: #{tpu_custom_call.1} parent=15 // pred_fallthru
          _
        // Predicated region
        $region25: #{tpu_custom_call.1} parent=15 // pred_check
          %p185 = pneg %p90
        $region26: #{tpu_custom_call.1} parent=15 // pred_check_branch
          %187 = sbr.rel (%p185) target = $region28
        $region27: #{tpu_custom_call.1} parent=15 // pred_region
          %s188 = sand.u32 %s18, 1
          %s189 = scalar_lea.sflag [#allocation6], %s188
          %s190 = sand.u32 %s80, 1
          %s191 = smul.addr %s190, 128
          %s192 = scalar_lea.vmem [#allocation7], %s191
          %194 = vsyncadd %s189, 0
          %s195 = smul.addr %s18, 16
          %s196 = smul.addr %s195, 8
          %s197 = scalar_lea.hbm %s2, %s196
          %s198 = sshll.u32 %s197, 4
          %s199 = int_to_ptr.hbm [resolvable:$true] %s198
          %s200 = sshll.u32 %s192, 4
          %s201 = int_to_ptr.vmem [resolvable:$true] %s200
          %206 = dma.hbm_to_vmem [thread:$0]  %s199, 2048, %s201, %s189, 128, 128, 8
        $region28: #{tpu_custom_call.1} parent=15 // pred_fallthru
          _
      $region16: #{tpu_custom_call.1} parent=5 // pred_fallthru
        _
      %p207 = scmp.le.s32.totalorder 1, %s18
      %p208 = scmp.lt.s32.totalorder %s18, 5
      %p209 = pnand %p207, %p208
      %p210 = pneg %p209
      // Predicated region
      $region29: #{tpu_custom_call.1} parent=5 // pred_check
        _
      $region30: #{tpu_custom_call.1} parent=5 // pred_check_branch
        %212 = sbr.rel (%p209) target = $region32
      $region31: #{tpu_custom_call.1} parent=5 // pred_region
        %s213 = ssub.s32 %s18, 1
        %s214 = sand.u32 %s31, 1
        %s215 = scalar_lea.sflag [#allocation3], %s214
        %s216 = sand.u32 %s31, 1
        %s217 = smul.addr %s216, 128
        %s218 = scalar_lea.vmem [#allocation2], %s217
        // Predicated region
        $region33: #{tpu_custom_call.1} parent=31 // pred_check
          %p219 = pneg %p44
        $region34: #{tpu_custom_call.1} parent=31 // pred_check_branch
          %221 = sbr.rel (%p219) target = $region36
        $region35: #{tpu_custom_call.1} parent=31 // pred_region
          %223 = dma.done %s215, 2048
        $region36: #{tpu_custom_call.1} parent=31 // pred_fallthru
          _
        %s224 = sand.u32 %s23, 1
        %s225 = scalar_lea.sflag [#allocation6], %s224
        %s226 = sand.u32 %s57, 1
        %s227 = smul.addr %s226, 128
        %s228 = scalar_lea.vmem [#allocation5], %s227
        // Predicated region
        $region37: #{tpu_custom_call.1} parent=31 // pred_check
          %p229 = pneg %p70
        $region38: #{tpu_custom_call.1} parent=31 // pred_check_branch
          %231 = sbr.rel (%p229) target = $region40
        $region39: #{tpu_custom_call.1} parent=31 // pred_region
          %233 = dma.done %s225, 2048
        $region40: #{tpu_custom_call.1} parent=31 // pred_fallthru
          _
        %s234 = sand.u32 %s23, 1
        %s235 = scalar_lea.sflag [#allocation6], %s234
        %s236 = sand.u32 %s83, 1
        %s237 = smul.addr %s236, 128
        %s238 = scalar_lea.vmem [#allocation7], %s237
        // Predicated region
        $region41: #{tpu_custom_call.1} parent=31 // pred_check
          %p239 = pneg %p96
        $region42: #{tpu_custom_call.1} parent=31 // pred_check_branch
          %241 = sbr.rel (%p239) target = $region44
        $region43: #{tpu_custom_call.1} parent=31 // pred_region
          %243 = dma.done %s235, 2048
        $region44: #{tpu_custom_call.1} parent=31 // pred_fallthru
          _
        %s244 = sand.u32 %s31, 1
        %s245 = scalar_lea.sflag [#allocation3], %s244
        %s246 = sand.u32 %s31, 1
        %s247 = smul.addr %s246, 128
        %s248 = scalar_lea.vmem [#allocation2], %s247
        %p249 = pneg %p44
        %p250 = pneg %p41
        %s251 = sand.u32 %s23, 1
        %s252 = scalar_lea.sflag [#allocation6], %s251
        %s253 = sand.u32 %s57, 1
        %s254 = smul.addr %s253, 128
        %s255 = scalar_lea.vmem [#allocation5], %s254
        %p256 = pneg %p70
        %p257 = pneg %p67
        %s258 = sand.u32 %s23, 1
        %s259 = scalar_lea.sflag [#allocation6], %s258
        %s260 = sand.u32 %s83, 1
        %s261 = smul.addr %s260, 128
        %s262 = scalar_lea.vmem [#allocation7], %s261
        %p263 = pneg %p96
        %p264 = pneg %p93
        %p265 = pneg %p122
        %p266 = pneg %p119
        %s267 = sand.u32 %s109, 1
        %s268 = scalar_lea.sflag [#allocation4], %s267
        %s269 = sand.u32 %s109, 1
        %s270 = smul.addr %s269, 128
        %s271 = scalar_lea.vmem [#allocation8], %s270
        %v272 = vld [vmem:[%s218] sm:$0xff]
        %v273 = vld [vmem:[%s218 + $0x8] sm:$0xff]
        %v274 = vld [vmem:[%s218 + $0x10] sm:$0xff]
        %v275 = vld [vmem:[%s218 + $0x18] sm:$0xff]
        %v276 = vld [vmem:[%s218 + $0x20] sm:$0xff]
        %v277 = vld [vmem:[%s218 + $0x28] sm:$0xff]
        %v278 = vld [vmem:[%s218 + $0x30] sm:$0xff]
        %v279 = vld [vmem:[%s218 + $0x38] sm:$0xff]
        %v280 = vld [vmem:[%s218 + $0x40] sm:$0xff]
        %v281 = vld [vmem:[%s218 + $0x48] sm:$0xff]
        %v282 = vld [vmem:[%s218 + $0x50] sm:$0xff]
        %v283 = vld [vmem:[%s218 + $0x58] sm:$0xff]
        %v284 = vld [vmem:[%s218 + $0x60] sm:$0xff]
        %v285 = vld [vmem:[%s218 + $0x68] sm:$0xff]
        %v286 = vld [vmem:[%s218 + $0x70] sm:$0xff]
        %v287 = vld [vmem:[%s218 + $0x78] sm:$0xff]
        %v288 = vld [vmem:[%s228] sm:$0xff]
        %v289 = vld [vmem:[%s228 + $0x8] sm:$0xff]
        %v290 = vld [vmem:[%s228 + $0x10] sm:$0xff]
        %v291 = vld [vmem:[%s228 + $0x18] sm:$0xff]
        %v292 = vld [vmem:[%s228 + $0x20] sm:$0xff]
        %v293 = vld [vmem:[%s228 + $0x28] sm:$0xff]
        %v294 = vld [vmem:[%s228 + $0x30] sm:$0xff]
        %v295 = vld [vmem:[%s228 + $0x38] sm:$0xff]
        %v296 = vld [vmem:[%s228 + $0x40] sm:$0xff]
        %v297 = vld [vmem:[%s228 + $0x48] sm:$0xff]
        %v298 = vld [vmem:[%s228 + $0x50] sm:$0xff]
        %v299 = vld [vmem:[%s228 + $0x58] sm:$0xff]
        %v300 = vld [vmem:[%s228 + $0x60] sm:$0xff]
        %v301 = vld [vmem:[%s228 + $0x68] sm:$0xff]
        %v302 = vld [vmem:[%s228 + $0x70] sm:$0xff]
        %v303 = vld [vmem:[%s228 + $0x78] sm:$0xff]
        %304 = vmatpush.msra.mxu0 %v303
        %305 = vmatpush.msra.mxu0 %v302
        %306 = vmatpush.msra.mxu0 %v301
        %307 = vmatpush.msra.mxu0 %v300
        %308 = vmatpush.msra.mxu0 %v299
        %309 = vmatpush.msra.mxu0 %v298
        %310 = vmatpush.msra.mxu0 %v297
        %311 = vmatpush.msra.mxu0 %v296
        %312 = vmatpush.msra.mxu0 %v295
        %313 = vmatpush.msra.mxu0 %v294
        %314 = vmatpush.msra.mxu0 %v293
        %315 = vmatpush.msra.mxu0 %v292
        %316 = vmatpush.msra.mxu0 %v291
        %317 = vmatpush.msra.mxu0 %v290
        %318 = vmatpush.msra.mxu0 %v289
        %319 = vmatpush.msra.mxu0 %v288
        %320 = vmatmul.f32.gmra.mxu0 %v272
        %v321 = vpop.f32.mrf.mxu0
        %v322 = vadd.f32 0.0, %v321
        %323 = vmatmul.f32.gmra.mxu0 %v273
        %v324 = vpop.f32.mrf.mxu0
        %v325 = vadd.f32 0.0, %v324
        %326 = vmatmul.f32.gmra.mxu0 %v274
        %v327 = vpop.f32.mrf.mxu0
        %v328 = vadd.f32 0.0, %v327
        %329 = vmatmul.f32.gmra.mxu0 %v275
        %v330 = vpop.f32.mrf.mxu0
        %v331 = vadd.f32 0.0, %v330
        %332 = vmatmul.f32.gmra.mxu0 %v276
        %v333 = vpop.f32.mrf.mxu0
        %v334 = vadd.f32 0.0, %v333
        %335 = vmatmul.f32.gmra.mxu0 %v277
        %v336 = vpop.f32.mrf.mxu0
        %v337 = vadd.f32 0.0, %v336
        %338 = vmatmul.f32.gmra.mxu0 %v278
        %v339 = vpop.f32.mrf.mxu0
        %v340 = vadd.f32 0.0, %v339
        %341 = vmatmul.f32.gmra.mxu0 %v279
        %v342 = vpop.f32.mrf.mxu0
        %v343 = vadd.f32 0.0, %v342
        %344 = vmatmul.f32.gmra.mxu0 %v280
        %v345 = vpop.f32.mrf.mxu0
        %v346 = vadd.f32 0.0, %v345
        %347 = vmatmul.f32.gmra.mxu0 %v281
        %v348 = vpop.f32.mrf.mxu0
        %v349 = vadd.f32 0.0, %v348
        %350 = vmatmul.f32.gmra.mxu0 %v282
        %v351 = vpop.f32.mrf.mxu0
        %v352 = vadd.f32 0.0, %v351
        %353 = vmatmul.f32.gmra.mxu0 %v283
        %v354 = vpop.f32.mrf.mxu0
        %v355 = vadd.f32 0.0, %v354
        %356 = vmatmul.f32.gmra.mxu0 %v284
        %v357 = vpop.f32.mrf.mxu0
        %v358 = vadd.f32 0.0, %v357
        %359 = vmatmul.f32.gmra.mxu0 %v285
        %v360 = vpop.f32.mrf.mxu0
        %v361 = vadd.f32 0.0, %v360
        %362 = vmatmul.f32.gmra.mxu0 %v286
        %v363 = vpop.f32.mrf.mxu0
        %v364 = vadd.f32 0.0, %v363
        %365 = vmatmul.f32.gmra.mxu0 %v287
        %v366 = vpop.f32.mrf.mxu0
        %v367 = vadd.f32 0.0, %v366
        %368 = vdwg.mxu0
        %v369 = vld [vmem:[%s238] sm:$0xff]
        %v370 = vld [vmem:[%s238 + $0x8] sm:$0xff]
        %v371 = vld [vmem:[%s238 + $0x10] sm:$0xff]
        %v372 = vld [vmem:[%s238 + $0x18] sm:$0xff]
        %v373 = vld [vmem:[%s238 + $0x20] sm:$0xff]
        %v374 = vld [vmem:[%s238 + $0x28] sm:$0xff]
        %v375 = vld [vmem:[%s238 + $0x30] sm:$0xff]
        %v376 = vld [vmem:[%s238 + $0x38] sm:$0xff]
        %v377 = vld [vmem:[%s238 + $0x40] sm:$0xff]
        %v378 = vld [vmem:[%s238 + $0x48] sm:$0xff]
        %v379 = vld [vmem:[%s238 + $0x50] sm:$0xff]
        %v380 = vld [vmem:[%s238 + $0x58] sm:$0xff]
        %v381 = vld [vmem:[%s238 + $0x60] sm:$0xff]
        %v382 = vld [vmem:[%s238 + $0x68] sm:$0xff]
        %v383 = vld [vmem:[%s238 + $0x70] sm:$0xff]
        %v384 = vld [vmem:[%s238 + $0x78] sm:$0xff]
        %385 = vmatpush.msra.mxu0 %v367
        %386 = vmatpush.msra.mxu0 %v364
        %387 = vmatpush.msra.mxu0 %v361
        %388 = vmatpush.msra.mxu0 %v358
        %389 = vmatpush.msra.mxu0 %v355
        %390 = vmatpush.msra.mxu0 %v352
        %391 = vmatpush.msra.mxu0 %v349
        %392 = vmatpush.msra.mxu0 %v346
        %393 = vmatpush.msra.mxu0 %v343
        %394 = vmatpush.msra.mxu0 %v340
        %395 = vmatpush.msra.mxu0 %v337
        %396 = vmatpush.msra.mxu0 %v334
        %397 = vmatpush.msra.mxu0 %v331
        %398 = vmatpush.msra.mxu0 %v328
        %399 = vmatpush.msra.mxu0 %v325
        %400 = vmatpush.msra.mxu0 %v322
        %401 = vmatmul.f32.gmra.mxu0 %v369
        %v402 = vpop.f32.mrf.mxu0
        %v403 = vadd.f32 0.0, %v402
        %404 = vmatmul.f32.gmra.mxu0 %v370
        %v405 = vpop.f32.mrf.mxu0
        %v406 = vadd.f32 0.0, %v405
        %407 = vmatmul.f32.gmra.mxu0 %v371
        %v408 = vpop.f32.mrf.mxu0
        %v409 = vadd.f32 0.0, %v408
        %410 = vmatmul.f32.gmra.mxu0 %v372
        %v411 = vpop.f32.mrf.mxu0
        %v412 = vadd.f32 0.0, %v411
        %413 = vmatmul.f32.gmra.mxu0 %v373
        %v414 = vpop.f32.mrf.mxu0
        %v415 = vadd.f32 0.0, %v414
        %416 = vmatmul.f32.gmra.mxu0 %v374
        %v417 = vpop.f32.mrf.mxu0
        %v418 = vadd.f32 0.0, %v417
        %419 = vmatmul.f32.gmra.mxu0 %v375
        %v420 = vpop.f32.mrf.mxu0
        %v421 = vadd.f32 0.0, %v420
        %422 = vmatmul.f32.gmra.mxu0 %v376
        %v423 = vpop.f32.mrf.mxu0
        %v424 = vadd.f32 0.0, %v423
        %425 = vmatmul.f32.gmra.mxu0 %v377
        %v426 = vpop.f32.mrf.mxu0
        %v427 = vadd.f32 0.0, %v426
        %428 = vmatmul.f32.gmra.mxu0 %v378
        %v429 = vpop.f32.mrf.mxu0
        %v430 = vadd.f32 0.0, %v429
        %431 = vmatmul.f32.gmra.mxu0 %v379
        %v432 = vpop.f32.mrf.mxu0
        %v433 = vadd.f32 0.0, %v432
        %434 = vmatmul.f32.gmra.mxu0 %v380
        %v435 = vpop.f32.mrf.mxu0
        %v436 = vadd.f32 0.0, %v435
        %437 = vmatmul.f32.gmra.mxu0 %v381
        %v438 = vpop.f32.mrf.mxu0
        %v439 = vadd.f32 0.0, %v438
        %440 = vmatmul.f32.gmra.mxu0 %v382
        %v441 = vpop.f32.mrf.mxu0
        %v442 = vadd.f32 0.0, %v441
        %443 = vmatmul.f32.gmra.mxu0 %v383
        %v444 = vpop.f32.mrf.mxu0
        %v445 = vadd.f32 0.0, %v444
        %446 = vmatmul.f32.gmra.mxu0 %v384
        %v447 = vpop.f32.mrf.mxu0
        %v448 = vadd.f32 0.0, %v447
        %449 = vdwg.mxu0
        %450 = vst [vmem:[%s271] sm:$0xff] %v403
        %451 = vst [vmem:[%s271 + $0x8] sm:$0xff] %v406
        %452 = vst [vmem:[%s271 + $0x10] sm:$0xff] %v409
        %453 = vst [vmem:[%s271 + $0x18] sm:$0xff] %v412
        %454 = vst [vmem:[%s271 + $0x20] sm:$0xff] %v415
        %455 = vst [vmem:[%s271 + $0x28] sm:$0xff] %v418
        %456 = vst [vmem:[%s271 + $0x30] sm:$0xff] %v421
        %457 = vst [vmem:[%s271 + $0x38] sm:$0xff] %v424
        %458 = vst [vmem:[%s271 + $0x40] sm:$0xff] %v427
        %459 = vst [vmem:[%s271 + $0x48] sm:$0xff] %v430
        %460 = vst [vmem:[%s271 + $0x50] sm:$0xff] %v433
        %461 = vst [vmem:[%s271 + $0x58] sm:$0xff] %v436
        %462 = vst [vmem:[%s271 + $0x60] sm:$0xff] %v439
        %463 = vst [vmem:[%s271 + $0x68] sm:$0xff] %v442
        %464 = vst [vmem:[%s271 + $0x70] sm:$0xff] %v445
        %465 = vst [vmem:[%s271 + $0x78] sm:$0xff] %v448
        %s466 = sand.u32 %s109, 1
        %s467 = scalar_lea.sflag [#allocation4], %s466
        %s468 = sand.u32 %s109, 1
        %s469 = smul.addr %s468, 128
        %s470 = scalar_lea.vmem [#allocation8], %s469
        // Predicated region
        $region45: #{tpu_custom_call.1} parent=31 // pred_check
          %p471 = pneg %p119
        $region46: #{tpu_custom_call.1} parent=31 // pred_check_branch
          %473 = sbr.rel (%p471) target = $region48
        $region47: #{tpu_custom_call.1} parent=31 // pred_region
          %475 = vsyncadd %s467, 0
          %s476 = smul.addr %s23, 16
          %s477 = smul.addr %s476, 8
          %s478 = scalar_lea.hbm %s3, %s477
          %s479 = sshll.u32 %s470, 4
          %s480 = int_to_ptr.vmem [resolvable:$true] %s479
          %s481 = sshll.u32 %s478, 4
          %s482 = int_to_ptr.hbm [resolvable:$true] %s481
          %487 = dma.vmem_to_hbm [thread:$0]  %s480, 2048, %s482, %s467, 128, 128, 8
        $region48: #{tpu_custom_call.1} parent=31 // pred_fallthru
          _
      $region32: #{tpu_custom_call.1} parent=5 // pred_fallthru
        _
      %p488 = scmp.le.s32.totalorder 2, %s18
      // Predicated region
      $region49: #{tpu_custom_call.1} parent=5 // pred_check
        %p489 = pneg %p488
      $region50: #{tpu_custom_call.1} parent=5 // pred_check_branch
        %491 = sbr.rel (%p489) target = $region52
      $region51: #{tpu_custom_call.1} parent=5 // pred_region
        %s492 = ssub.s32 %s18, 2
        // Predicated region
        $region53: #{tpu_custom_call.1} parent=51 // pred_check
          %p493 = pneg %p125
        $region54: #{tpu_custom_call.1} parent=51 // pred_check_branch
          %495 = sbr.rel (%p493) target = $region56
        $region55: #{tpu_custom_call.1} parent=51 // pred_region
          %s496 = sand.u32 %s110, 1
          %s497 = scalar_lea.sflag [#allocation4], %s496
          %s498 = sand.u32 %s110, 1
          %s499 = smul.addr %s498, 128
          %s500 = scalar_lea.vmem [#allocation8], %s499
          %502 = dma.done %s497, 2048
        $region56: #{tpu_custom_call.1} parent=51 // pred_fallthru
          _
      $region52: #{tpu_custom_call.1} parent=5 // pred_fallthru
        _
    $region6: #{tpu_custom_call.1} parent=1 // loop_footer
      %s22 = sadd.s32 1, %s18
    $region7: #{tpu_custom_call.1} parent=1 // loop_footer_branch
      %17 = sbr.rel target = $region3
    $region8: #{tpu_custom_call.1} parent=1 // loop_exit
      _
    %503 = vsyncpa [#allocation3], 1
    %s504 = scalar_lea.sflag [#allocation3], 1
    %505 = vsyncpa %s504, 1
    %506 = vsyncpa [#allocation6], 1
    %s507 = scalar_lea.sflag [#allocation6], 1
    %508 = vsyncpa %s507, 1
    %509 = vsyncpa [#allocation4], 1
    %s510 = scalar_lea.sflag [#allocation4], 1
    %511 = vsyncpa %s510, 1

</llo_original>
